<compile_context>
chip_gen: v6e
topology: v6e:2x2x1
jax: 0.10.0
libtpu: 0.0.40
codegen_flags: <defaults>
</compile_context>

<pallas_src>
import jax
import jax.numpy as jnp
from jax.experimental import pallas as pl
from jax.experimental.pallas import tpu as pltpu


def _increase_block_kernel(xs_ref, w_ref, g_ref, b_ref, out_ref):
    # xs_ref : (1, 4*Cin, H*W)   shifted taps stacked tap-major, pixels on lanes
    # w_ref  : (4*Cout, 4*Cin)   combined parity/tap weight (zero-filled)
    # g_ref  : (Cout, 1) gamma ;  b_ref : (Cout, 1) beta
    # out_ref: (1, 4, Cout, H*W) parity-split output (parity index = 2*r + s)
    n_par = out_ref.shape[1]
    cout = out_ref.shape[2]
    hw = out_ref.shape[3]

    # Single MXU push: (4*Cout, 4*Cin) @ (4*Cin, H*W) -> (4*Cout, H*W), f32 accumulate.
    y = jnp.dot(w_ref[...], xs_ref[0], preferred_element_type=jnp.float32)
    y4 = y.reshape(n_par, cout, hw)  # sublane-aligned split: (4, Cout, H*W)

    # GroupNorm with num_groups == Cout: per-channel stats over all 4*H*W output pixels.
    inv_n = 1.0 / float(n_par * hw)
    s = jnp.sum(y4, axis=0)                                   # (Cout, H*W)
    mean = jnp.sum(s, axis=1, keepdims=True) * inv_n          # (Cout, 1)
    yc = y4 - mean[None]                                      # centered (two-pass var)
    v = jnp.sum(yc * yc, axis=0)                              # (Cout, H*W)
    var = jnp.sum(v, axis=1, keepdims=True) * inv_n           # (Cout, 1)
    scale = (g_ref[...] * jax.lax.rsqrt(var + 1e-5))[None]    # (1, Cout, 1) — EUP rsqrt
    shift = b_ref[...][None]                                  # (1, Cout, 1)

    out_ref[0] = jnp.maximum(yc * scale + shift, 0.0)


def increase_block_forward(x_nchw, t, w_oihw, b, gamma, beta):
    """Pallas implementation of IncreaseBlock.forward(x, t) -> (z, t).

    x_nchw: (N, Cin, H, W) float32 (PyTorch NCHW convention)
    w_oihw: ConvTranspose2d weight, PyTorch layout (Cin, Cout, 3, 3)
    b, gamma, beta: (Cout,)
    returns z: (N, Cout, 2H, 2W), t unchanged.
    """
    del b  # ConvTranspose2d bias cancels exactly under GroupNorm(groups == Cout)

    N, Cin, H, W = x_nchw.shape
    Cout = w_oihw.shape[1]
    HW = H * W

    # --- XLA glue: stack the 4 shifted taps, tap-major: (0,0),(0,1),(1,0),(1,1) ---
    x_pad = jnp.pad(x_nchw.astype(jnp.float32), ((0, 0), (0, 0), (0, 1), (0, 1)))
    xs = jnp.stack(
        [x_pad[:, :, 0:H, 0:W],          # tap 0: x[p,   q  ]
         x_pad[:, :, 0:H, 1:W + 1],      # tap 1: x[p,   q+1]
         x_pad[:, :, 1:H + 1, 0:W],      # tap 2: x[p+1, q  ]
         x_pad[:, :, 1:H + 1, 1:W + 1]], # tap 3: x[p+1, q+1]
        axis=1)                          # (N, 4, Cin, H, W)
    xs = xs.reshape(N, 4 * Cin, HW)

    # --- XLA glue: combined parity/tap weight (4*Cout, 4*Cin), zero-filled -----------
    # ConvTranspose2d(k=3, s=2, p=1, op=1) parity decomposition (W[kh,kw] is the (Cin,Cout)
    # slice of the PyTorch weight at kernel position (kh,kw)):
    #   out[2p,   2q  ] = x00 * W[1,1]
    #   out[2p,   2q+1] = x01 * W[1,0] + x00 * W[1,2]
    #   out[2p+1, 2q  ] = x10 * W[0,1] + x00 * W[2,1]
    #   out[2p+1, 2q+1] = x11 * W[0,0] + x10 * W[0,2] + x01 * W[2,0] + x00 * W[2,2]
    def wtap(kh, kw):
        return jnp.transpose(w_oihw[:, :, kh, kw]).astype(jnp.float32)  # (Cout, Cin)

    wc = jnp.zeros((4, Cout, 4, Cin), jnp.float32)
    wc = wc.at[0, :, 0].set(wtap(1, 1))
    wc = wc.at[1, :, 1].set(wtap(1, 0))
    wc = wc.at[1, :, 0].set(wtap(1, 2))
    wc = wc.at[2, :, 2].set(wtap(0, 1))
    wc = wc.at[2, :, 0].set(wtap(2, 1))
    wc = wc.at[3, :, 3].set(wtap(0, 0))
    wc = wc.at[3, :, 2].set(wtap(0, 2))
    wc = wc.at[3, :, 1].set(wtap(2, 0))
    wc = wc.at[3, :, 0].set(wtap(2, 2))
    wc = wc.reshape(4 * Cout, 4 * Cin)

    g2 = gamma.reshape(Cout, 1).astype(jnp.float32)
    be2 = beta.reshape(Cout, 1).astype(jnp.float32)

    out = pl.pallas_call(
        _increase_block_kernel,
        out_shape=jax.ShapeDtypeStruct((N, 4, Cout, HW), jnp.float32),
        grid_spec=pltpu.PrefetchScalarGridSpec(
            num_scalar_prefetch=0,
            grid=(N,),
            in_specs=[
                pl.BlockSpec((1, 4 * Cin, HW), lambda n: (n, 0, 0)),
                pl.BlockSpec((4 * Cout, 4 * Cin), lambda n: (0, 0)),
                pl.BlockSpec((Cout, 1), lambda n: (0, 0)),
                pl.BlockSpec((Cout, 1), lambda n: (0, 0)),
            ],
            out_specs=pl.BlockSpec((1, 4, Cout, HW), lambda n: (n, 0, 0, 0)),
        ),
        compiler_params=pltpu.CompilerParams(
            dimension_semantics=("parallel",)),
    )(xs, wc, g2, be2)

    # --- XLA glue: parity interleave back to NCHW (pure layout, one transpose) -------
    z = out.reshape(N, 2, 2, Cout, H, W)                 # (n, r, s, c, p, q)
    z = jnp.transpose(z, (0, 3, 4, 1, 5, 2)).reshape(N, Cout, 2 * H, 2 * W)
    return z, t


def _reference_forward(x_nchw, w_oihw, b, gamma, beta):
    """Pure-JAX reference: ConvTranspose2d(3, s=2, p=1, op=1) + GroupNorm(C groups) + ReLU."""
    Cout = w_oihw.shape[1]
    # transposed conv == lhs-dilated conv with spatially flipped, channel-swapped kernel
    wf = jnp.flip(w_oihw, axis=(2, 3)).transpose(1, 0, 2, 3)  # (Cout, Cin, 3, 3)
    y = jax.lax.conv_general_dilated(
        x_nchw, wf, window_strides=(1, 1), padding=((1, 2), (1, 2)),
        lhs_dilation=(2, 2), dimension_numbers=("NCHW", "OIHW", "NCHW"))
    y = y + b.reshape(1, Cout, 1, 1)
    mean = y.mean(axis=(2, 3), keepdims=True)
    var = y.var(axis=(2, 3), keepdims=True)
    yn = (y - mean) * jax.lax.rsqrt(var + 1e-5)
    yn = yn * gamma.reshape(1, Cout, 1, 1) + beta.reshape(1, Cout, 1, 1)
    return jnp.maximum(yn, 0.0)


if __name__ == "__main__":
    N, Cin, Cout, H, W = 2, 4, 8, 16, 16

    key = jax.random.PRNGKey(0)
    kx, kt, kw, kb, kg, kbe = jax.random.split(key, 6)
    x = jax.random.normal(kx, (N, Cin, H, W), dtype=jnp.float32)
    t = jax.random.normal(kt, (N, 32), dtype=jnp.float32)        # passthrough arg
    w = 0.2 * jax.random.normal(kw, (Cin, Cout, 3, 3), dtype=jnp.float32)
    b = 0.1 * jax.random.normal(kb, (Cout,), dtype=jnp.float32)
    gamma = 1.0 + 0.1 * jax.random.normal(kg, (Cout,), dtype=jnp.float32)
    beta = 0.1 * jax.random.normal(kbe, (Cout,), dtype=jnp.float32)

    z, t_out = increase_block_forward(x, t, w, b, gamma, beta)
    z = jax.block_until_ready(z)
    t_out = jax.block_until_ready(t_out)

    assert z.shape == (N, Cout, 2 * H, 2 * W), z.shape
    assert t_out.shape == t.shape

    z_ref = _reference_forward(x, w, b, gamma, beta)
    assert jnp.allclose(z, z_ref, atol=1e-3, rtol=1e-3), \
        float(jnp.max(jnp.abs(z - z_ref)))
    assert jnp.allclose(t_out, t), "t must pass through unchanged"

    print("KERNEL_OK")
</pallas_src>

<mosaic_0001>
module attributes {stable_mosaic.version = 11 : i64} {
  func.func @_increase_block_kernel(%arg0: i32, %arg1: memref<1x16x256xf32, #tpu.memory_space<vmem>>, %arg2: memref<32x16xf32, #tpu.memory_space<vmem>>, %arg3: memref<8x1xf32, #tpu.memory_space<vmem>>, %arg4: memref<8x1xf32, #tpu.memory_space<vmem>>, %arg5: memref<1x4x8x256xf32, #tpu.memory_space<vmem>>) attributes {dimension_semantics = [#tpu.dimension_semantics<parallel>], iteration_bounds = array<i64: 2>, scalar_prefetch = 0 : i64, scratch_operands = 0 : i64, tpu.core_type = #tpu.core_type<tc>, window_params = [{transform_indices = @transform_0, window_bounds = array<i64: 1, 16, 256>}, {pipeline_mode = #tpu.pipeline_mode<synchronous>, transform_indices = @transform_1, window_bounds = array<i64: 32, 16>}, {pipeline_mode = #tpu.pipeline_mode<synchronous>, transform_indices = @transform_2, window_bounds = array<i64: 8, 1>}, {pipeline_mode = #tpu.pipeline_mode<synchronous>, transform_indices = @transform_3, window_bounds = array<i64: 8, 1>}, {transform_indices = @transform_4, window_bounds = array<i64: 1, 4, 8, 256>}]} {
    %c0 = arith.constant 0 : index
    %c0_0 = arith.constant 0 : index
    %0 = vector.load %arg2[%c0, %c0_0] : memref<32x16xf32, #tpu.memory_space<vmem>>, vector<32x16xf32>
    %c0_1 = arith.constant 0 : index
    %c0_2 = arith.constant 0 : index
    %c0_3 = arith.constant 0 : index
    %1 = vector.load %arg1[%c0_1, %c0_2, %c0_3] : memref<1x16x256xf32, #tpu.memory_space<vmem>>, vector<1x16x256xf32>
    %2 = vector.shape_cast %1 : vector<1x16x256xf32> to vector<16x256xf32>
    %cst = arith.constant dense<0.000000e+00> : vector<32x256xf32>
    %3 = tpu.matmul %0, %2, %cst {dimension_numbers = #tpu.dot_dimension_numbers<[1], [0], [0], [1], [0, 0, 1, 1], [], []>} : vector<32x16xf32>, vector<16x256xf32>, vector<32x256xf32> -> vector<32x256xf32>
    %4 = vector.shape_cast %3 : vector<32x256xf32> to vector<4x8x256xf32>
    %cst_4 = arith.constant dense<0.000000e+00> : vector<8x256xf32>
    %5 = vector.multi_reduction <add>, %4, %cst_4 [0] : vector<4x8x256xf32> to vector<8x256xf32>
    %cst_5 = arith.constant dense<0.000000e+00> : vector<8xf32>
    %6 = vector.multi_reduction <add>, %5, %cst_5 [1] : vector<8x256xf32> to vector<8xf32>
    %7 = vector.shape_cast %6 : vector<8xf32> to vector<8x1xf32>
    %cst_6 = arith.constant 9.765625E-4 : f32
    %8 = vector.broadcast %cst_6 : f32 to vector<8x1xf32>
    %9 = arith.mulf %7, %8 : vector<8x1xf32>
    %10 = vector.shape_cast %9 : vector<8x1xf32> to vector<1x8x1xf32>
    %11 = vector.broadcast %10 : vector<1x8x1xf32> to vector<4x8x256xf32>
    %12 = arith.subf %4, %11 : vector<4x8x256xf32>
    %13 = arith.mulf %12, %12 : vector<4x8x256xf32>
    %cst_7 = arith.constant dense<0.000000e+00> : vector<8x256xf32>
    %14 = vector.multi_reduction <add>, %13, %cst_7 [0] : vector<4x8x256xf32> to vector<8x256xf32>
    %cst_8 = arith.constant dense<0.000000e+00> : vector<8xf32>
    %15 = vector.multi_reduction <add>, %14, %cst_8 [1] : vector<8x256xf32> to vector<8xf32>
    %16 = vector.shape_cast %15 : vector<8xf32> to vector<8x1xf32>
    %cst_9 = arith.constant 9.765625E-4 : f32
    %17 = vector.broadcast %cst_9 : f32 to vector<8x1xf32>
    %18 = arith.mulf %16, %17 : vector<8x1xf32>
    %c0_10 = arith.constant 0 : index
    %c0_11 = arith.constant 0 : index
    %19 = vector.load %arg3[%c0_10, %c0_11] : memref<8x1xf32, #tpu.memory_space<vmem>>, vector<8x1xf32>
    %cst_12 = arith.constant 9.99999974E-6 : f32
    %20 = vector.broadcast %cst_12 : f32 to vector<8x1xf32>
    %21 = arith.addf %18, %20 : vector<8x1xf32>
    %22 = math.rsqrt %21 : vector<8x1xf32>
    %23 = arith.mulf %19, %22 : vector<8x1xf32>
    %24 = vector.shape_cast %23 : vector<8x1xf32> to vector<1x8x1xf32>
    %c0_13 = arith.constant 0 : index
    %c0_14 = arith.constant 0 : index
    %25 = vector.load %arg4[%c0_13, %c0_14] : memref<8x1xf32, #tpu.memory_space<vmem>>, vector<8x1xf32>
    %26 = vector.shape_cast %25 : vector<8x1xf32> to vector<1x8x1xf32>
    %27 = vector.broadcast %24 : vector<1x8x1xf32> to vector<4x8x256xf32>
    %28 = arith.mulf %12, %27 : vector<4x8x256xf32>
    %29 = vector.broadcast %26 : vector<1x8x1xf32> to vector<4x8x256xf32>
    %30 = arith.addf %28, %29 : vector<4x8x256xf32>
    %cst_15 = arith.constant 0.000000e+00 : f32
    %31 = vector.broadcast %cst_15 : f32 to vector<4x8x256xf32>
    %32 = arith.maximumf %30, %31 : vector<4x8x256xf32>
    %c0_16 = arith.constant 0 : index
    %c0_17 = arith.constant 0 : index
    %c0_18 = arith.constant 0 : index
    %c0_19 = arith.constant 0 : index
    %33 = vector.load %arg5[%c0_16, %c0_17, %c0_18, %c0_19] : memref<1x4x8x256xf32, #tpu.memory_space<vmem>>, vector<1x4x8x256xf32>
    %34 = vector.shape_cast %33 : vector<1x4x8x256xf32> to vector<4x8x256xf32>
    %35 = vector.shape_cast %32 : vector<4x8x256xf32> to vector<1x4x8x256xf32>
    tpu.vector_store %arg5[%c0_16, %c0_17, %c0_18, %c0_19], %35 {strides = array<i32>} : memref<1x4x8x256xf32, #tpu.memory_space<vmem>>, vector<1x4x8x256xf32>,
    return
  }
  func.func @transform_0(%arg0: i32) -> (i32, i32, i32) {
    %c0_i32 = arith.constant 0 : i32
    %c0_i32_0 = arith.constant 0 : i32
    %c0_i32_1 = arith.constant 0 : i32
    return %arg0, %c0_i32, %c0_i32_0 : i32, i32, i32
  }
  func.func @transform_1(%arg0: i32) -> (i32, i32) {
    %c0_i32 = arith.constant 0 : i32
    %c0_i32_0 = arith.constant 0 : i32
    %c0_i32_1 = arith.constant 0 : i32
    return %c0_i32, %c0_i32_0 : i32, i32
  }
  func.func @transform_2(%arg0: i32) -> (i32, i32) {
    %c0_i32 = arith.constant 0 : i32
    %c0_i32_0 = arith.constant 0 : i32
    %c0_i32_1 = arith.constant 0 : i32
    return %c0_i32, %c0_i32_0 : i32, i32
  }
  func.func @transform_3(%arg0: i32) -> (i32, i32) {
    %c0_i32 = arith.constant 0 : i32
    %c0_i32_0 = arith.constant 0 : i32
    %c0_i32_1 = arith.constant 0 : i32
    return %c0_i32, %c0_i32_0 : i32, i32
  }
  func.func @transform_4(%arg0: i32) -> (i32, i32, i32, i32) {
    %c0_i32 = arith.constant 0 : i32
    %c0_i32_0 = arith.constant 0 : i32
    %c0_i32_1 = arith.constant 0 : i32
    %c0_i32_2 = arith.constant 0 : i32
    return %arg0, %c0_i32, %c0_i32_0, %c0_i32_1 : i32, i32, i32, i32
  }
}

</mosaic_0001>

<llo_original>
// kernel: tpu_custom_call.1
$region0: #{tpu_custom_call.1}
  #allocation0 [shape = 'u32[]', space=smem, size = 0x4, offset = 0x4, fixed_abs, tag = 'smem constant byte address 0x4 - core index']
  #allocation1 [shape = 'u32[144,128]{1,0:T(1,128)}', space=vmem, size = 0x12000, scoped, tag = 'internal scratch']
  %s0 = inlined_call_operand.vmem [shape: f32[2,16,256], index: 0, kind: input, shape index: {}]
  %s1 = inlined_call_operand.vmem [shape: f32[32,16], index: 1, kind: input, shape index: {}]
  %s2 = inlined_call_operand.vmem [shape: f32[8,1], index: 2, kind: input, shape index: {}]
  %s3 = inlined_call_operand.vmem [shape: f32[8,1], index: 3, kind: input, shape index: {}]
  %s4 = inlined_call_operand.hbm [shape: f32[2,4,8,256], index: 4, kind: output, shape index: {}]
  %s5 = sld [smem:[#allocation0]]
  $region49: #{tpu_custom_call.1} parent=0
    _
  %s7 = ssub.s32 1, %s5
  %s8 = scalar_select 0, %s7, %s5
  $region1: #{tpu_custom_call.1} parent=0
    #allocation2 [shape = 'u8[65536]{0}', space=vmem, size = 0x10000, scoped, tag = 'output window, operand 0']
    #allocation3 [shape = 's32[2]{0}', space=sflag, size = 0x8, scoped, tag = 'scoped memory for tpu_custom_call.1']
    %9 = vsyncpa [#allocation3], 0
    %s10 = scalar_lea.sflag [#allocation3], 1
    %11 = vsyncpa %s10, 0
    loop: start=0, step=1, limit=4
    $region2: #{tpu_custom_call.1} parent=1 // loop_pre_header
      _
    $region3: #{tpu_custom_call.1} parent=1 // loop_header
      %s13 = sphi 0, %s17
      %p14 = scmp.ge.s32.totalorder %s13, 4
      %s23 = sphi 0, %s25
      %s26 = sphi 0, %s23
      %s27 = sphi 0, %s26
      %s43 = sphi 0, %s27
      %s47 = sphi 0, %s47
      %s49 = sphi 0, %s47
      %s50 = sphi 0, %s49
      %s64 = sphi 0, %s50
      %s68 = sphi 0, %s68
      %s70 = sphi 0, %s68
      %s71 = sphi 0, %s70
      %s85 = sphi 0, %s71
      %s89 = sphi 0, %s89
      %s91 = sphi 0, %s89
      %s92 = sphi 0, %s91
      %s106 = sphi 0, %s92
      %s112 = sphi 0, %s114
      %s115 = sphi 0, %s112
      %s116 = sphi 0, %s115
      %s132 = sphi 0, %s116
    $region4: #{tpu_custom_call.1} parent=1 // loop_header_branch
      %16 = sbr.rel (%p14) target = $region8
    $region5: #{tpu_custom_call.1} parent=1 // loop_body
      %s18 = ssub.s32 %s13, 1
      %s19 = ssub.s32 %s13, 2
      %s20 = sadd.s32 %s13, 1
      %s21 = ssub.s32 %s13, %s20
      %p22 = scmp.eq.s32.totalorder %s21, 0
      %s24 = sadd.s32 %s23, 1
      %s25 = scalar_select %p22, %s23, %s24
      %p28 = pneg %p22
      %p29 = scmp.eq.s32.totalorder %s13, 1
      %p30 = por %p28, %p29
      %p31 = scmp.ne.s32.totalorder %s23, %s26
      %p32 = scmp.eq.s32.totalorder %s13, 0
      %p33 = por %p31, %p32
      %p34 = scmp.ne.s32.totalorder %s23, %s26
      %p35 = scmp.eq.s32.totalorder %s18, 1
      %p36 = por %p34, %p35
      %p37 = scmp.ne.s32.totalorder %s26, %s27
      %p38 = scmp.eq.s32.totalorder %s18, 0
      %p39 = por %p37, %p38
      %p40 = scmp.ne.s32.totalorder %s26, %s27
      %p41 = scmp.eq.s32.totalorder %s19, 1
      %p42 = por %p40, %p41
      %p44 = scmp.ne.s32.totalorder %s27, %s43
      %p45 = scmp.eq.s32.totalorder %s19, 0
      %p46 = por %p44, %p45
      %s48 = sadd.s32 %s47, 1
      %p51 = scmp.eq.s32.totalorder %s13, 1
      %p52 = scmp.ne.s32.totalorder %s47, %s49
      %p53 = scmp.eq.s32.totalorder %s13, 0
      %p54 = por %p52, %p53
      %p55 = scmp.ne.s32.totalorder %s47, %s49
      %p56 = scmp.eq.s32.totalorder %s18, 1
      %p57 = por %p55, %p56
      %p58 = scmp.ne.s32.totalorder %s49, %s50
      %p59 = scmp.eq.s32.totalorder %s18, 0
      %p60 = por %p58, %p59
      %p61 = scmp.ne.s32.totalorder %s49, %s50
      %p62 = scmp.eq.s32.totalorder %s19, 1
      %p63 = por %p61, %p62
      %p65 = scmp.ne.s32.totalorder %s50, %s64
      %p66 = scmp.eq.s32.totalorder %s19, 0
      %p67 = por %p65, %p66
      %s69 = sadd.s32 %s68, 1
      %p72 = scmp.eq.s32.totalorder %s13, 1
      %p73 = scmp.ne.s32.totalorder %s68, %s70
      %p74 = scmp.eq.s32.totalorder %s13, 0
      %p75 = por %p73, %p74
      %p76 = scmp.ne.s32.totalorder %s68, %s70
      %p77 = scmp.eq.s32.totalorder %s18, 1
      %p78 = por %p76, %p77
      %p79 = scmp.ne.s32.totalorder %s70, %s71
      %p80 = scmp.eq.s32.totalorder %s18, 0
      %p81 = por %p79, %p80
      %p82 = scmp.ne.s32.totalorder %s70, %s71
      %p83 = scmp.eq.s32.totalorder %s19, 1
      %p84 = por %p82, %p83
      %p86 = scmp.ne.s32.totalorder %s71, %s85
      %p87 = scmp.eq.s32.totalorder %s19, 0
      %p88 = por %p86, %p87
      %s90 = sadd.s32 %s89, 1
      %p93 = scmp.eq.s32.totalorder %s13, 1
      %p94 = scmp.ne.s32.totalorder %s89, %s91
      %p95 = scmp.eq.s32.totalorder %s13, 0
      %p96 = por %p94, %p95
      %p97 = scmp.ne.s32.totalorder %s89, %s91
      %p98 = scmp.eq.s32.totalorder %s18, 1
      %p99 = por %p97, %p98
      %p100 = scmp.ne.s32.totalorder %s91, %s92
      %p101 = scmp.eq.s32.totalorder %s18, 0
      %p102 = por %p100, %p101
      %p103 = scmp.ne.s32.totalorder %s91, %s92
      %p104 = scmp.eq.s32.totalorder %s19, 1
      %p105 = por %p103, %p104
      %p107 = scmp.ne.s32.totalorder %s92, %s106
      %p108 = scmp.eq.s32.totalorder %s19, 0
      %p109 = por %p107, %p108
      %s110 = ssub.s32 %s13, %s20
      %p111 = scmp.eq.s32.totalorder %s110, 0
      %s113 = sadd.s32 %s112, 1
      %s114 = scalar_select %p111, %s112, %s113
      %p117 = pneg %p111
      %p118 = scmp.eq.s32.totalorder %s13, 1
      %p119 = por %p117, %p118
      %p120 = scmp.ne.s32.totalorder %s112, %s115
      %p121 = scmp.eq.s32.totalorder %s13, 0
      %p122 = por %p120, %p121
      %p123 = scmp.ne.s32.totalorder %s112, %s115
      %p124 = scmp.eq.s32.totalorder %s18, 1
      %p125 = por %p123, %p124
      %p126 = scmp.ne.s32.totalorder %s115, %s116
      %p127 = scmp.eq.s32.totalorder %s18, 0
      %p128 = por %p126, %p127
      %p129 = scmp.ne.s32.totalorder %s115, %s116
      %p130 = scmp.eq.s32.totalorder %s19, 1
      %p131 = por %p129, %p130
      %p133 = scmp.ne.s32.totalorder %s116, %s132
      %p134 = scmp.eq.s32.totalorder %s19, 0
      %p135 = por %p133, %p134
      %p136 = scmp.le.s32.totalorder 1, %s13
      %p137 = scmp.lt.s32.totalorder %s13, 3
      %p138 = pnand %p136, %p137
      %p139 = pneg %p138
      // Predicated region
      $region9: #{tpu_custom_call.1} parent=5 // pred_check
        _
      $region10: #{tpu_custom_call.1} parent=5 // pred_check_branch
        %141 = sbr.rel (%p138) target = $region12
      $region11: #{tpu_custom_call.1} parent=5 // pred_region
        %s142 = ssub.s32 %s13, 1
        // Predicated region
        $region13: #{tpu_custom_call.1} parent=11 // pred_check
          %p143 = pneg %p60
        $region14: #{tpu_custom_call.1} parent=11 // pred_check_branch
          %145 = sbr.rel (%p143) target = $region16
        $region15: #{tpu_custom_call.1} parent=11 // pred_region
          _
        $region16: #{tpu_custom_call.1} parent=11 // pred_fallthru
          _
        // Predicated region
        $region17: #{tpu_custom_call.1} parent=11 // pred_check
          %p146 = pneg %p81
        $region18: #{tpu_custom_call.1} parent=11 // pred_check_branch
          %148 = sbr.rel (%p146) target = $region20
        $region19: #{tpu_custom_call.1} parent=11 // pred_region
          _
        $region20: #{tpu_custom_call.1} parent=11 // pred_fallthru
          _
        // Predicated region
        $region21: #{tpu_custom_call.1} parent=11 // pred_check
          %p149 = pneg %p102
        $region22: #{tpu_custom_call.1} parent=11 // pred_check_branch
          %151 = sbr.rel (%p149) target = $region24
        $region23: #{tpu_custom_call.1} parent=11 // pred_region
          _
        $region24: #{tpu_custom_call.1} parent=11 // pred_fallthru
          _
      $region12: #{tpu_custom_call.1} parent=5 // pred_fallthru
        _
      %p152 = scmp.lt.s32.totalorder %s13, 2
      // Predicated region
      $region25: #{tpu_custom_call.1} parent=5 // pred_check
        %p153 = pneg %p152
      $region26: #{tpu_custom_call.1} parent=5 // pred_check_branch
        %155 = sbr.rel (%p153) target = $region28
      $region27: #{tpu_custom_call.1} parent=5 // pred_region
        // Predicated region
        $region29: #{tpu_custom_call.1} parent=27 // pred_check
          %p156 = pneg %p33
        $region30: #{tpu_custom_call.1} parent=27 // pred_check_branch
          %158 = sbr.rel (%p156) target = $region32
        $region31: #{tpu_custom_call.1} parent=27 // pred_region
          %p159 = scmp.lt.s32.totalorder %s13, 1
          %s160 = scalar_select %p159, %s13, 1
          %s161 = smul.addr %s160, 4
          %s162 = smul.addr %s161, 8
          %s163 = scalar_lea.vmem %s0, %s162
        $region32: #{tpu_custom_call.1} parent=27 // pred_fallthru
          _
      $region28: #{tpu_custom_call.1} parent=5 // pred_fallthru
        _
      %p164 = scmp.le.s32.totalorder 1, %s13
      %p165 = scmp.lt.s32.totalorder %s13, 3
      %p166 = pnand %p164, %p165
      %p167 = pneg %p166
      // Predicated region
      $region33: #{tpu_custom_call.1} parent=5 // pred_check
        _
      $region34: #{tpu_custom_call.1} parent=5 // pred_check_branch
        %169 = sbr.rel (%p166) target = $region36
      $region35: #{tpu_custom_call.1} parent=5 // pred_region
        %s170 = ssub.s32 %s13, 1
        %p171 = scmp.lt.s32.totalorder %s18, 1
        %s172 = scalar_select %p171, %s18, 1
        %s173 = smul.addr %s172, 4
        %s174 = smul.addr %s173, 8
        %s175 = scalar_lea.vmem %s0, %s174
        %p176 = pneg %p39
        %p177 = pneg %p36
        %p178 = pneg %p60
        %p179 = pneg %p57
        %p180 = pneg %p81
        %p181 = pneg %p78
        %p182 = pneg %p102
        %p183 = pneg %p99
        %p184 = pneg %p128
        %p185 = pneg %p125
        %s186 = sand.u32 %s115, 1
        %s187 = scalar_lea.sflag [#allocation3], %s186
        %s188 = sand.u32 %s115, 1
        %s189 = smul.addr %s188, 64
        %s190 = scalar_lea.vmem [#allocation2], %s189
        %p191 = scmp.lt.s32.totalorder %s18, 1
        %s192 = scalar_select %p191, %s18, 1
        %s193 = smul.addr %s192, 4
        %s194 = smul.addr %s193, 8
        %s195 = scalar_lea.vmem %s0, %s194
        %v196 = vld [vmem:[%s1] sm:$0xff]
        %v197 = vld [vmem:[%s1 + $0x8] sm:$0xff]
        %v198 = vld [vmem:[%s1 + $0x10] sm:$0xff]
        %v199 = vld [vmem:[%s1 + $0x18] sm:$0xff]
        %v200 = vld [vmem:[%s195] sm:$0xff]
        %v201 = vld [vmem:[%s195 + $0x8] sm:$0xff]
        %v202 = vld [vmem:[%s195 + $0x10] sm:$0xff]
        %v203 = vld [vmem:[%s195 + $0x18] sm:$0xff]
        %vm204 = vcmask 130048
        %v206 = vsel %vm204, %v196, 0
        %v209 = vsel %vm204, %v197, 0
        %v212 = vsel %vm204, %v198, 0
        %v215 = vsel %vm204, %v199, 0
        %217 = vmatprep.subr.mxu0 0.0
        %218 = vmatpush1.msra.mxu0 0.0
        %219 = vmatprep.subr.mxu0 0.0
        %220 = vmatpush1.msra.mxu0 0.0
        %221 = vmatprep.subr.mxu0 0.0
        %222 = vmatpush1.msra.mxu0 0.0
        %223 = vmatprep.subr.mxu0 0.0
        %224 = vmatpush1.msra.mxu0 0.0
        %225 = vmatprep.subr.mxu0 0.0
        %226 = vmatpush1.msra.mxu0 0.0
        %227 = vmatprep.subr.mxu0 0.0
        %228 = vmatpush1.msra.mxu0 0.0
        %229 = vmatprep.subr.mxu0 0.0
        %230 = vmatpush1.msra.mxu0 0.0
        %231 = vmatprep.subr.mxu0 0.0
        %232 = vmatpush1.msra.mxu0 0.0
        %233 = vmatprep.subr.mxu0 0.0
        %234 = vmatpush1.msra.mxu0 0.0
        %235 = vmatprep.subr.mxu0 0.0
        %236 = vmatpush1.msra.mxu0 0.0
        %237 = vmatprep.subr.mxu0 0.0
        %238 = vmatpush1.msra.mxu0 0.0
        %239 = vmatprep.subr.mxu0 0.0
        %240 = vmatpush1.msra.mxu0 0.0
        %241 = vmatprep.subr.mxu0 0.0
        %242 = vmatpush1.msra.mxu0 0.0
        %243 = vmatprep.subr.mxu0 0.0
        %244 = vmatpush1.msra.mxu0 0.0
        %245 = vmatprep.subr.mxu0 %v203
        %246 = vmatpush1.msra.mxu0 %v202
        %247 = vmatprep.subr.mxu0 %v201
        %248 = vmatpush1.msra.mxu0 %v200
        %249 = vmatprep.subr.mxu0 0.0
        %250 = vmatpush2.msra.mxu0 0.0
        %251 = vmatprep.subr.mxu0 0.0
        %252 = vmatpush2.msra.mxu0 0.0
        %253 = vmatprep.subr.mxu0 0.0
        %254 = vmatpush2.msra.mxu0 0.0
        %255 = vmatprep.subr.mxu0 0.0
        %256 = vmatpush2.msra.mxu0 0.0
        %257 = vmatprep.subr.mxu0 0.0
        %258 = vmatpush2.msra.mxu0 0.0
        %259 = vmatprep.subr.mxu0 0.0
        %260 = vmatpush2.msra.mxu0 0.0
        %261 = vmatprep.subr.mxu0 0.0
        %262 = vmatpush2.msra.mxu0 0.0
        %263 = vmatprep.subr.mxu0 0.0
        %264 = vmatpush2.msra.mxu0 0.0
        %265 = vmatprep.subr.mxu0 0.0
        %266 = vmatpush2.msra.mxu0 0.0
        %267 = vmatprep.subr.mxu0 0.0
        %268 = vmatpush2.msra.mxu0 0.0
        %269 = vmatprep.subr.mxu0 0.0
        %270 = vmatpush2.msra.mxu0 0.0
        %271 = vmatprep.subr.mxu0 0.0
        %272 = vmatpush2.msra.mxu0 0.0
        %273 = vmatprep.subr.mxu0 0.0
        %274 = vmatpush2.msra.mxu0 0.0
        %275 = vmatprep.subr.mxu0 0.0
        %276 = vmatpush2.msra.mxu0 0.0
        %277 = vmatprep.subr.mxu0 0.0
        %278 = vmatpush2.msra.mxu0 0.0
        %279 = vmatprep.subr.mxu0 0.0
        %280 = vmatpush2.msra.mxu0 0.0
        %281 = vmatprep.mubr.f32.mxu0 0.0
        %282 = vmatmul.mubr.f32.gmra.mxu0 %v206
        %v283 = vpop.f32.mrf.mxu0
        %v284 = vadd.f32 0.0, %v283
        %v285 = vpop.f32.mrf.mxu0
        %v286 = vadd.f32 0.0, %v285
        %287 = vmatprep.mubr.f32.mxu0 0.0
        %288 = vmatmul.mubr.f32.gmra.mxu0 %v209
        %v289 = vpop.f32.mrf.mxu0
        %v290 = vadd.f32 0.0, %v289
        %v291 = vpop.f32.mrf.mxu0
        %v292 = vadd.f32 0.0, %v291
        %293 = vmatprep.mubr.f32.mxu0 0.0
        %294 = vmatmul.mubr.f32.gmra.mxu0 %v212
        %v295 = vpop.f32.mrf.mxu0
        %v296 = vadd.f32 0.0, %v295
        %v297 = vpop.f32.mrf.mxu0
        %v298 = vadd.f32 0.0, %v297
        %299 = vmatprep.mubr.f32.mxu0 0.0
        %300 = vmatmul.mubr.f32.gmra.mxu0 %v215
        %v301 = vpop.f32.mrf.mxu0
        %v302 = vadd.f32 0.0, %v301
        %v303 = vpop.f32.mrf.mxu0
        %v304 = vadd.f32 0.0, %v303
        %305 = vdwg.mxu0
        %v306 = vadd.f32 %v284, %v290
        %v307 = vadd.f32 %v306, %v296
        %v308 = vadd.f32 %v307, %v302
        %v309 = vadd.f32 %v286, %v292
        %v310 = vadd.f32 %v309, %v298
        %v311 = vadd.f32 %v310, %v304
        %v312 = vadd.f32 %v308, %v311
        %313 = vadd.xlane.f32.xlu0 %v312
        %v314 = vpop.xlane.xlu0 %313
        %v315 = vmul.f32 %v314, 0.0009765625
        %v316 = vsub.f32 %v284, %v315
        %v317 = vsub.f32 %v286, %v315
        %v318 = vsub.f32 %v290, %v315
        %v319 = vsub.f32 %v292, %v315
        %v320 = vsub.f32 %v296, %v315
        %v321 = vsub.f32 %v298, %v315
        %v322 = vsub.f32 %v302, %v315
        %v323 = vsub.f32 %v304, %v315
        %v324 = vmul.f32 %v316, %v316
        %v325 = vmul.f32 %v317, %v317
        %v326 = vmul.f32 %v318, %v318
        %v327 = vmul.f32 %v319, %v319
        %v328 = vmul.f32 %v320, %v320
        %v329 = vmul.f32 %v321, %v321
        %v330 = vmul.f32 %v322, %v322
        %v331 = vmul.f32 %v323, %v323
        %v332 = vadd.f32 %v324, %v326
        %v333 = vadd.f32 %v332, %v328
        %v334 = vadd.f32 %v333, %v330
        %v335 = vadd.f32 %v325, %v327
        %v336 = vadd.f32 %v335, %v329
        %v337 = vadd.f32 %v336, %v331
        %v338 = vadd.f32 %v334, %v337
        %339 = vadd.xlane.f32.xlu0 %v338
        %v340 = vpop.xlane.xlu0 %339
        %v341 = vmul.f32 %v340, 0.0009765625
        %v342 = vld [vmem:[%s2] sm:$0xff]
        %v343 = vadd.f32 %v341, 1e-05
        %v344 = vrsqrt.pop %v343
        %v345 = vmul.f32 %v342, %v344
        %v346 = vld [vmem:[%s3] sm:$0xff]
        %348 = vset.pattern.permute.xlu0 0
        %349 = vperm.xlu0 %348, %v345
        %v350 = vpop.permute.xlu0 %349
        %v352 = vmul.f32 %v316, %v350
        %v353 = vmul.f32 %v317, %v350
        %v354 = vmul.f32 %v318, %v350
        %v355 = vmul.f32 %v319, %v350
        %v356 = vmul.f32 %v320, %v350
        %v357 = vmul.f32 %v321, %v350
        %v358 = vmul.f32 %v322, %v350
        %v359 = vmul.f32 %v323, %v350
        %361 = vset.pattern.permute.xlu0 0
        %362 = vperm.xlu0 %361, %v346
        %v363 = vpop.permute.xlu0 %362
        %v365 = vadd.f32 %v352, %v363
        %v366 = vadd.f32 %v353, %v363
        %v367 = vadd.f32 %v354, %v363
        %v368 = vadd.f32 %v355, %v363
        %v369 = vadd.f32 %v356, %v363
        %v370 = vadd.f32 %v357, %v363
        %v371 = vadd.f32 %v358, %v363
        %v372 = vadd.f32 %v359, %v363
        %v373 = vmax.f32 %v365, 0.0
        %v374 = vmax.f32 %v366, 0.0
        %v375 = vmax.f32 %v367, 0.0
        %v376 = vmax.f32 %v368, 0.0
        %v377 = vmax.f32 %v369, 0.0
        %v378 = vmax.f32 %v370, 0.0
        %v379 = vmax.f32 %v371, 0.0
        %v380 = vmax.f32 %v372, 0.0
        %381 = vst [vmem:[%s190] sm:$0xff] %v373
        %382 = vst [vmem:[%s190 + $0x8] sm:$0xff] %v374
        %383 = vst [vmem:[%s190 + $0x10] sm:$0xff] %v375
        %384 = vst [vmem:[%s190 + $0x18] sm:$0xff] %v376
        %385 = vst [vmem:[%s190 + $0x20] sm:$0xff] %v377
        %386 = vst [vmem:[%s190 + $0x28] sm:$0xff] %v378
        %387 = vst [vmem:[%s190 + $0x30] sm:$0xff] %v379
        %388 = vst [vmem:[%s190 + $0x38] sm:$0xff] %v380
        %s389 = sand.u32 %s115, 1
        %s390 = scalar_lea.sflag [#allocation3], %s389
        %s391 = sand.u32 %s115, 1
        %s392 = smul.addr %s391, 64
        %s393 = scalar_lea.vmem [#allocation2], %s392
        // Predicated region
        $region37: #{tpu_custom_call.1} parent=35 // pred_check
          %p394 = pneg %p125
        $region38: #{tpu_custom_call.1} parent=35 // pred_check_branch
          %396 = sbr.rel (%p394) target = $region40
        $region39: #{tpu_custom_call.1} parent=35 // pred_region
          %s398 = ssub.s32 1024, 1024
          %399 = vsyncadd %s390, %s398
          %s400 = smul.addr %s18, 8
          %s401 = smul.addr %s400, 128
          %s402 = scalar_lea.hbm %s4, %s401
          %s403 = sshll.u32 %s393, 4
          %s404 = int_to_ptr.vmem [resolvable:$true] %s403
          %409 = dma.vmem_to_hbm [thread:$0]  %s404, 1024, %s402, %s390, 256, 256, 16
        $region40: #{tpu_custom_call.1} parent=35 // pred_fallthru
          _
      $region36: #{tpu_custom_call.1} parent=5 // pred_fallthru
        _
      %p410 = scmp.le.s32.totalorder 2, %s13
      // Predicated region
      $region41: #{tpu_custom_call.1} parent=5 // pred_check
        %p411 = pneg %p410
      $region42: #{tpu_custom_call.1} parent=5 // pred_check_branch
        %413 = sbr.rel (%p411) target = $region44
      $region43: #{tpu_custom_call.1} parent=5 // pred_region
        %s414 = ssub.s32 %s13, 2
        // Predicated region
        $region45: #{tpu_custom_call.1} parent=43 // pred_check
          %p415 = pneg %p131
        $region46: #{tpu_custom_call.1} parent=43 // pred_check_branch
          %417 = sbr.rel (%p415) target = $region48
        $region47: #{tpu_custom_call.1} parent=43 // pred_region
          %s418 = sand.u32 %s116, 1
          %s419 = scalar_lea.sflag [#allocation3], %s418
          %s420 = sand.u32 %s116, 1
          %s421 = smul.addr %s420, 64
          %s422 = scalar_lea.vmem [#allocation2], %s421
          %423 = dma.done %s419, 1024
        $region48: #{tpu_custom_call.1} parent=43 // pred_fallthru
          _
      $region44: #{tpu_custom_call.1} parent=5 // pred_fallthru
        _
    $region6: #{tpu_custom_call.1} parent=1 // loop_footer
      %s17 = sadd.s32 1, %s13
    $region7: #{tpu_custom_call.1} parent=1 // loop_footer_branch
      %12 = sbr.rel target = $region3
    $region8: #{tpu_custom_call.1} parent=1 // loop_exit
      _
    %424 = vsyncpa [#allocation3], 1
    %s425 = scalar_lea.sflag [#allocation3], 1
    %426 = vsyncpa %s425, 1

</llo_original>
